<compile_context>
chip_gen: v5e
topology: v5e:2x2
jax: 0.10.0
libtpu: 0.0.40
codegen_flags: <defaults>
</compile_context>

<pallas_src>
import jax
import jax.numpy as jnp
from jax.experimental import pallas as pl
from jax.experimental.pallas import tpu as pltpu

_N_ELEMS = 4  # (1, 4) -> 4 elements; mean divides by this constant.


def _l1_kernel(xy_ref, out_ref):
    # xy_ref: (2, 4) f32 in VMEM; row 0 = yhat, row 1 = y.
    diff = xy_ref[0:1, :] - xy_ref[1:2, :]          # (1, 4), VPU elementwise
    out_ref[0, 0] = jnp.sum(jnp.abs(diff)) * (1.0 / _N_ELEMS)


def l1_loss(yhat: jax.Array, y: jax.Array) -> jax.Array:
    assert yhat.shape == (1, 4), yhat.shape
    assert y.shape == (1, 4), y.shape

    # Stack both operands into a single (2, 4) f32 array -> one input DMA.
    xy = jnp.concatenate(
        [yhat.astype(jnp.float32), y.astype(jnp.float32)], axis=0
    )

    out = pl.pallas_call(
        _l1_kernel,
        out_shape=jax.ShapeDtypeStruct((1, 1), jnp.float32),
        in_specs=[
            pl.BlockSpec(memory_space=pltpu.VMEM),   # stacked (2, 4) block
        ],
        out_specs=pl.BlockSpec(memory_space=pltpu.SMEM),  # scalar result
    )(xy)
    # 0-d scalar, matching the PyTorch module's 0-d tensor output.
    return out.reshape(())


if __name__ == "__main__":
    key = jax.random.PRNGKey(0)
    k1, k2 = jax.random.split(key)
    yhat = jax.random.normal(k1, (1, 4), dtype=jnp.float32)
    y = jax.random.normal(k2, (1, 4), dtype=jnp.float32)

    loss = jax.block_until_ready(l1_loss(yhat, y))

    # Reference check in plain JAX (same semantics as the PyTorch forward).
    ref = jnp.mean(jnp.abs(yhat - y))
    assert jnp.allclose(loss, ref, rtol=1e-6, atol=1e-6), (loss, ref)

    print("KERNEL_OK")
</pallas_src>

<mosaic_0001>
module attributes {stable_mosaic.version = 11 : i64} {
  func.func @_l1_kernel(%arg0: memref<2x4xf32, #tpu.memory_space<vmem>>, %arg1: memref<1x1xf32, #tpu.memory_space<smem>>) attributes {dimension_semantics = [], scalar_prefetch = 0 : i64, scratch_operands = 0 : i64, tpu.core_type = #tpu.core_type<tc>} {
    %c0 = arith.constant 0 : index
    %c0_0 = arith.constant 0 : index
    %0 = vector.load %arg0[%c0, %c0_0] : memref<2x4xf32, #tpu.memory_space<vmem>>, vector<1x4xf32>
    %c1 = arith.constant 1 : index
    %c0_1 = arith.constant 0 : index
    %1 = vector.load %arg0[%c1, %c0_1] : memref<2x4xf32, #tpu.memory_space<vmem>>, vector<1x4xf32>
    %2 = arith.subf %0, %1 : vector<1x4xf32>
    %3 = math.absf %2 : vector<1x4xf32>
    %4 = vector.shape_cast %3 : vector<1x4xf32> to vector<1x1x4xf32>
    %cst = arith.constant dense<0.000000e+00> : vector<1xf32>
    %5 = vector.multi_reduction <add>, %4, %cst [1, 2] : vector<1x1x4xf32> to vector<1xf32>
    %6 = vector.shape_cast %5 : vector<1xf32> to vector<1x1x1xf32>
    %7 = vector.extract %6[0, 0, 0] : f32 from vector<1x1x1xf32>
    %cst_2 = arith.constant 2.500000e-01 : f32
    %8 = arith.mulf %7, %cst_2 : f32
    %c0_3 = arith.constant 0 : index
    %c0_4 = arith.constant 0 : index
    %9 = memref.load %arg1[%c0_3, %c0_4] : memref<1x1xf32, #tpu.memory_space<smem>>
    memref.store %8, %arg1[%c0_3, %c0_4] : memref<1x1xf32, #tpu.memory_space<smem>>
    return
  }
}

</mosaic_0001>

<llo_original>
// kernel: tpu_custom_call.1
$region0: #{tpu_custom_call.1}
  #allocation0 [shape = 'u32[]', space=smem, size = 0x4, offset = 0x4, fixed_abs, tag = 'smem constant byte address 0x4 - core index']
  #allocation1 [shape = 'u32[72,128]{1,0:T(1,128)}', space=vmem, size = 0x9000, scoped, tag = 'internal scratch']
  %s0 = inlined_call_operand.hbm [shape: f32[2,4], index: 0, kind: input, shape index: {}]
  %s1 = inlined_call_operand.hbm [shape: f32[1,1], index: 1, kind: output, shape index: {}]
  %s2 = sld [smem:[#allocation0]]
  $region18: #{tpu_custom_call.1} parent=0
    _
  %s4 = ssub.s32 1, %s2
  %s5 = scalar_select 0, %s4, %s2
  $region1: #{tpu_custom_call.1} parent=0
    #allocation2 [shape = 'u8[1024]{0}', space=vmem, size = 0x400, scoped, tag = 'input window, operand 0, single buffered']
    #allocation3 [shape = 's32[1]{0}', space=sflag, size = 0x4, scoped, tag = 'scoped memory for tpu_custom_call.1']
    #allocation4 [shape = 's32[1]{0}', space=sflag, size = 0x4, scoped, tag = 'scoped memory for tpu_custom_call.1']
    #allocation5 [shape = 'u8[512]{0}', space=smem, size = 0x200, scoped, tag = 'output window, operand 0, single buffered']
    %6 = vsyncpa [#allocation3], 0
    %7 = vsyncpa [#allocation4], 0
    // Predicated region
    $region2: #{tpu_custom_call.1} parent=1 // pred_check
      _
    $region3: #{tpu_custom_call.1} parent=1 // pred_check_branch
      %9 = sbr.rel (0) target = $region5
    $region4: #{tpu_custom_call.1} parent=1 // pred_region
      %11 = vsyncadd [#allocation3], 0
      %s13 = sshll.u32 %s0, 4
      %s14 = int_to_ptr.hbm [resolvable:$true] %s13
      %s15 = sshll.u32 [#allocation2], 4
      %s16 = int_to_ptr.vmem [resolvable:$true] %s15
      %18 = dma.hbm_to_vmem [thread:$0]  %s14, 32, %s16, [#allocation3]
    $region5: #{tpu_custom_call.1} parent=1 // pred_fallthru
      _
    // Predicated region
    $region6: #{tpu_custom_call.1} parent=1 // pred_check
      _
    $region7: #{tpu_custom_call.1} parent=1 // pred_check_branch
      %20 = sbr.rel (0) target = $region9
    $region8: #{tpu_custom_call.1} parent=1 // pred_region
      %22 = dma.done [#allocation3], 32
    $region9: #{tpu_custom_call.1} parent=1 // pred_fallthru
      _
    %v23 = vld [vmem:[#allocation2] sm:$0x1]
    %v24 = vld [vmem:[#allocation2 + $0x1] sm:$0x1]
    %v25 = vsub.f32 %v23, %v24
    %v26 = vand.u32 2147483647, %v25
    %vm27 = vcmask 24576
    %v28 = vsel %vm27, %v26, 0.0
    %29 = vadd.xlane.f32.xlu0 %v28
    %v30 = vpop.xlane.xlu0 %29
    %v31 = vrot.slane %v30, 4
    %v32 = vadd.f32 %v30, %v31
    %v33 = vrot.slane %v32, 2
    %v34 = vadd.f32 %v32, %v33
    %v35 = vrot.slane %v34, 1
    %v36 = vadd.f32 %v34, %v35
    %s37 = vtos %v36
    %s38 = smul.f32 %s37, 0.25
    %s39 = scalar_lea.smem [#allocation5], 0
    %40 = sst [smem:[%s39]] %s38
    // Predicated region
    $region10: #{tpu_custom_call.1} parent=1 // pred_check
      _
    $region11: #{tpu_custom_call.1} parent=1 // pred_check_branch
      %42 = sbr.rel (0) target = $region13
    $region12: #{tpu_custom_call.1} parent=1 // pred_region
      %44 = vsyncadd [#allocation4], 0
      %s46 = sshll.u32 %s1, 4
      %s47 = int_to_ptr.hbm [resolvable:$true] %s46
      %49 = dma.smem_to_hbm [#allocation5], 16, %s47, [#allocation4]
    $region13: #{tpu_custom_call.1} parent=1 // pred_fallthru
      _
    // Predicated region
    $region14: #{tpu_custom_call.1} parent=1 // pred_check
      _
    $region15: #{tpu_custom_call.1} parent=1 // pred_check_branch
      %51 = sbr.rel (0) target = $region17
    $region16: #{tpu_custom_call.1} parent=1 // pred_region
      %53 = dma.done [#allocation4], 16
    $region17: #{tpu_custom_call.1} parent=1 // pred_fallthru
      _
    %54 = sfence
    %55 = vsyncpa [#allocation3], 1
    %56 = vsyncpa [#allocation4], 1

</llo_original>
